<compile_context>
chip_gen: v5e
topology: v5e:2x2
jax: 0.10.0
libtpu: 0.0.40
codegen_flags: <defaults>
</compile_context>

<pallas_src>
import functools

import jax
import jax.numpy as jnp
from jax.experimental import pallas as pl
from jax.experimental.pallas import tpu as pltpu

_LANE = 128     # lane width (last vreg dim)
_SUBLANE = 8    # f32 sublane count (second-to-last vreg dim)


def _round_up(n, m):
    return ((n + m - 1) // m) * m


def _vmem_capacity_bytes():
    """Physical VMEM of the local TPU.  Falls back to the v7x per-TC 64 MiB."""
    try:
        cap = getattr(pltpu.get_tpu_info(), "vmem_capacity_bytes", None)
        if cap:
            return int(cap)
    except Exception:
        pass
    return 64 * 1024 * 1024


def _default_act_dtype():
    """bf16 activations on v6e/v7x (bf16 VPU/EUP), f32 on v5e and older."""
    try:
        kind = jax.devices()[0].device_kind.lower()
    except Exception:
        return jnp.float32
    if any(v in kind for v in ("v2", "v3", "v4", "v5")):
        return jnp.float32
    return jnp.bfloat16


def _use_narrow_out(out_features):
    return out_features < _LANE


def _mlp_kernel(n_layers, narrow_out, act_dtype, *refs):
    """refs = (x_ref, w0, b0, w1, b1, ..., out_ref).

    Hidden-layer weights are pre-transposed/zero-padded to (in_pad, out_pad)
    with out_pad a multiple of 128; biases are (1, out_pad) f32.  If
    `narrow_out`, the LAST weight is kept in (out_f, in_pad) layout with a
    (out_f, 1) f32 bias and the output tile is written as (out_f, tb) — batch
    on the lane axis, so the HBM writeback stays lane-dense without padding.
    Matmuls accumulate in f32; bias adds are f32; tanh runs in `act_dtype`.
    The Python layer loop is fully unrolled at trace time.
    """
    x_ref = refs[0]
    out_ref = refs[-1]
    param_refs = refs[1:-1]
    assert len(param_refs) == 2 * n_layers

    h = x_ref[...]                                   # (tb, in_feat)
    for l in range(n_layers):
        w = param_refs[2 * l][...]
        b = param_refs[2 * l + 1][...]
        lhs = h if h.dtype == w.dtype else h.astype(w.dtype)
        last = l == n_layers - 1
        if last and narrow_out:
            # (out_f, in_pad) @ (in_pad, tb) -> (out_f, tb); the h transpose is
            # XLU work (free slot here), far cheaper than a padded HBM store.
            acc = jnp.dot(w, lhs.T, preferred_element_type=jnp.float32)
            out_ref[...] = acc + b                   # b: (out_f, 1) f32
        else:
            acc = jnp.dot(lhs, w, preferred_element_type=jnp.float32)
            h = acc + b                              # f32 bias add
            if last:
                out_ref[...] = h                     # lane-dense (tb, out_pad)
            else:
                h = jnp.tanh(h.astype(act_dtype))    # hidden-layer tanh


def prepare_params(weights, biases, *, matmul_dtype=jnp.bfloat16):
    """One-time parameter prep (torch layout -> kernel layout).

    weights[l]: (out, in) like torch; biases[l]: (out,).
    Hidden/wide layers become (in_pad, out_pad) weights (out_pad multiple of
    128, zero padded => math unchanged) + (1, out_pad) f32 biases.  If the
    final out_features < 128, the last layer stays (out_f, in_pad) with an
    (out_f, 1) f32 bias for the transposed narrow-output path.  Weights are
    stored in `matmul_dtype` (bf16 by default: MXU fast path, half the DMA).
    """
    n = len(weights)
    out_features = weights[0 - 1].shape[0]
    narrow_out = _use_narrow_out(out_features)
    params = []
    prev_pad = weights[0].shape[1]        # raw input features; x is not padded
    for l, (w, b) in enumerate(zip(weights, biases)):
        out_f, in_f = w.shape
        last = l == n - 1
        wf = jnp.asarray(w, jnp.float32)
        bf = jnp.asarray(b, jnp.float32)
        if last and narrow_out:
            wt = jnp.zeros((out_f, prev_pad), matmul_dtype)
            wt = wt.at[:, :in_f].set(wf.astype(matmul_dtype))
            bt = bf.reshape(out_f, 1)
        else:
            out_pad = _round_up(out_f, _LANE)
            wt = jnp.zeros((prev_pad, out_pad), matmul_dtype)
            wt = wt.at[:in_f, :out_f].set(wf.T.astype(matmul_dtype))
            bt = jnp.zeros((1, out_pad), jnp.float32)
            bt = bt.at[0, :out_f].set(bf)
            prev_pad = out_pad
        params.extend([wt, bt])
    return tuple(params), out_features


def _pick_batch_tile(B, batch_tile, narrow_out):
    """Batch tile: big (pipeline-overhead amortization), aligned so output
    blocks stay legal/lane-dense, and split in two when the whole batch would
    otherwise be one grid step (lets v7x shard the 'parallel' axis over 2 TCs)."""
    align = _LANE if narrow_out else _SUBLANE
    tb = min(batch_tile, B)
    if tb < B:
        tb = _round_up(tb, align)
    elif B >= 2 * align:
        half = _round_up(pl.cdiv(B, 2), align)
        if half < B:
            tb = half
    return tb


def net_uniform_forward(x, params, out_features, *, batch_tile=512,
                        act_dtype=None):
    """x: (B, in_features) f32; params: flat tuple from prepare_params."""
    n_layers = len(params) // 2
    B, in_feat = x.shape
    narrow_out = _use_narrow_out(out_features)
    if act_dtype is None:
        act_dtype = _default_act_dtype()

    tb = _pick_batch_tile(B, batch_tile, narrow_out)
    grid = (pl.cdiv(B, tb),)

    x_spec = pl.BlockSpec((tb, in_feat), lambda i: (i, 0))
    # Constant index_map => params stay VMEM-resident across batch tiles.
    param_specs = [pl.BlockSpec(p.shape, lambda i: (0, 0)) for p in params]

    if narrow_out:
        # Transposed narrow output: (out_f, B), batch on the lane axis.
        out_shape = jax.ShapeDtypeStruct((out_features, B), jnp.float32)
        out_spec = pl.BlockSpec((out_features, tb), lambda i: (0, i))
        out_bytes = out_features * B * 4
        out_tile_bytes = out_features * tb * 4
    else:
        out_pad = params[-2].shape[-1]
        out_shape = jax.ShapeDtypeStruct((B, out_pad), jnp.float32)
        out_spec = pl.BlockSpec((tb, out_pad), lambda i: (i, 0))
        out_bytes = B * out_pad * 4
        out_tile_bytes = tb * out_pad * 4

    # Advisory cost estimate (padded shapes) to help XLA overlap the call.
    flops = 0
    transcendentals = 0
    bytes_accessed = x.size * x.dtype.itemsize + out_bytes
    for l in range(n_layers):
        w = params[2 * l]
        b = params[2 * l + 1]
        flops += 2 * B * w.shape[0] * w.shape[1]
        if l < n_layers - 1:
            transcendentals += B * w.shape[1]
        bytes_accessed += w.size * w.dtype.itemsize + b.size * b.dtype.itemsize

    # Generation-aware VMEM budget: double-buffered x/out tiles + resident
    # params (double-counted for the default buffering) + headroom, capped at
    # physical VMEM minus 16 MiB (128 MiB-class on v5e/v6e, 64 MiB/TC on v7x).
    tile_bytes = 2 * (tb * in_feat * 4 + out_tile_bytes)
    param_bytes = sum(2 * p.size * p.dtype.itemsize for p in params)
    cap = _vmem_capacity_bytes()
    vmem_limit = max(tile_bytes + param_bytes + (8 << 20), 32 << 20)
    vmem_limit = min(vmem_limit, max(cap - (16 << 20), 32 << 20))

    out = pl.pallas_call(
        functools.partial(_mlp_kernel, n_layers, narrow_out, act_dtype),
        out_shape=out_shape,
        grid=grid,
        in_specs=[x_spec] + param_specs,
        out_specs=out_spec,
        compiler_params=pltpu.CompilerParams(
            dimension_semantics=("parallel",),
            vmem_limit_bytes=int(vmem_limit)),
        cost_estimate=pl.CostEstimate(
            flops=int(flops),
            transcendentals=int(transcendentals),
            bytes_accessed=int(bytes_accessed)),
    )(x, *params)

    if narrow_out:
        return out.T                    # (B, out_features); trivial for out_f=1
    # Wide path: padding columns are exact zeros; slice off.
    return out[:, :out_features]


def make_params(key, layers):
    """Matches Net_Uniform.__init__: weight ~ U(0,1); bias at PyTorch-default
    style uniform(-1/sqrt(in), 1/sqrt(in))."""
    weights, biases = [], []
    for in_size, out_size in zip(layers, layers[1:]):
        key, kw, kb = jax.random.split(key, 3)
        w = jax.random.uniform(kw, (out_size, in_size), jnp.float32, 0.0, 1.0)
        bound = 1.0 / jnp.sqrt(jnp.float32(in_size))
        b = jax.random.uniform(kb, (out_size,), jnp.float32, -bound, bound)
        weights.append(w)
        biases.append(b)
    return weights, biases


def reference_forward(x, weights, biases, matmul_dtype=jnp.float32,
                      act_dtype=jnp.float32):
    """Pure-JAX reference mirroring the kernel's numerics (dtype of matmul
    operands / tanh) so the tolerance check stays tight."""
    h = jnp.asarray(x, jnp.float32)
    n = len(weights)
    for l, (w, b) in enumerate(zip(weights, biases)):
        wl = jnp.asarray(w, jnp.float32).astype(matmul_dtype)
        lhs = h.astype(matmul_dtype)
        h = jnp.dot(lhs, wl.T, preferred_element_type=jnp.float32) \
            + jnp.asarray(b, jnp.float32)
        if l < n - 1:
            h = jnp.tanh(h.astype(act_dtype)).astype(jnp.float32)
    return h


if __name__ == "__main__":
    layers = [4, 32, 32, 1]   # Layers argument of Net_Uniform
    batch = 8

    key = jax.random.PRNGKey(0)
    key, kx = jax.random.split(key)
    x = jax.random.normal(kx, (batch, layers[0]), jnp.float32)
    weights, biases = make_params(key, layers)

    # One-time parameter prep (bf16 weights by default; biases stay f32).
    params, out_features = prepare_params(weights, biases,
                                          matmul_dtype=jnp.bfloat16)

    act_dtype = _default_act_dtype()   # bf16 on v6e/v7x, f32 on v5e and older
    fwd = jax.jit(functools.partial(net_uniform_forward,
                                    out_features=out_features,
                                    act_dtype=act_dtype))
    out = jax.block_until_ready(fwd(x, params))

    ref = reference_forward(x, weights, biases,
                            matmul_dtype=jnp.bfloat16, act_dtype=act_dtype)
    assert out.shape == (batch, layers[-1]), out.shape
    assert jnp.allclose(out, ref, atol=2e-2, rtol=2e-2), \
        float(jnp.max(jnp.abs(out - ref)))

    print("KERNEL_OK")
</pallas_src>

<mosaic_0001>
module attributes {stable_mosaic.version = 11 : i64} {
  func.func @_mlp_kernel(%arg0: i32, %arg1: memref<8x4xf32, #tpu.memory_space<vmem>>, %arg2: memref<4x128xbf16, #tpu.memory_space<vmem>>, %arg3: memref<1x128xf32, #tpu.memory_space<vmem>>, %arg4: memref<128x128xbf16, #tpu.memory_space<vmem>>, %arg5: memref<1x128xf32, #tpu.memory_space<vmem>>, %arg6: memref<1x128xbf16, #tpu.memory_space<vmem>>, %arg7: memref<1x1xf32, #tpu.memory_space<vmem>>, %arg8: memref<1x8xf32, #tpu.memory_space<vmem>>) attributes {dimension_semantics = [#tpu.dimension_semantics<parallel>], iteration_bounds = array<i64: 1>, scalar_prefetch = 0 : i64, scratch_operands = 0 : i64, tpu.core_type = #tpu.core_type<tc>, window_params = [{transform_indices = @transform_0, window_bounds = array<i64: 8, 4>}, {pipeline_mode = #tpu.pipeline_mode<synchronous>, transform_indices = @transform_1, window_bounds = array<i64: 4, 128>}, {pipeline_mode = #tpu.pipeline_mode<synchronous>, transform_indices = @transform_2, window_bounds = array<i64: 1, 128>}, {pipeline_mode = #tpu.pipeline_mode<synchronous>, transform_indices = @transform_3, window_bounds = array<i64: 128, 128>}, {pipeline_mode = #tpu.pipeline_mode<synchronous>, transform_indices = @transform_4, window_bounds = array<i64: 1, 128>}, {pipeline_mode = #tpu.pipeline_mode<synchronous>, transform_indices = @transform_5, window_bounds = array<i64: 1, 128>}, {pipeline_mode = #tpu.pipeline_mode<synchronous>, transform_indices = @transform_6, window_bounds = array<i64: 1, 1>}, {transform_indices = @transform_7, window_bounds = array<i64: 1, 8>}]} {
    %c0 = arith.constant 0 : index
    %c0_0 = arith.constant 0 : index
    %0 = vector.load %arg1[%c0, %c0_0] : memref<8x4xf32, #tpu.memory_space<vmem>>, vector<8x4xf32>
    %c0_1 = arith.constant 0 : index
    %c0_2 = arith.constant 0 : index
    %1 = vector.load %arg2[%c0_1, %c0_2] : memref<4x128xbf16, #tpu.memory_space<vmem>>, vector<4x128xbf16>
    %c0_3 = arith.constant 0 : index
    %c0_4 = arith.constant 0 : index
    %2 = vector.load %arg3[%c0_3, %c0_4] : memref<1x128xf32, #tpu.memory_space<vmem>>, vector<1x128xf32>
    %3 = arith.truncf %0 : vector<8x4xf32> to vector<8x4xbf16>
    %cst = arith.constant dense<0.000000e+00> : vector<8x128xf32>
    %4 = tpu.matmul %3, %1, %cst {dimension_numbers = #tpu.dot_dimension_numbers<[1], [0], [0], [1], [0, 0, 1, 1], [], []>} : vector<8x4xbf16>, vector<4x128xbf16>, vector<8x128xf32> -> vector<8x128xf32>
    %5 = vector.broadcast %2 : vector<1x128xf32> to vector<8x128xf32>
    %6 = arith.addf %4, %5 : vector<8x128xf32>
    %7 = arith.truncf %6 : vector<8x128xf32> to vector<8x128xbf16>
    %8 = math.tanh %7 : vector<8x128xbf16>
    %c0_5 = arith.constant 0 : index
    %c0_6 = arith.constant 0 : index
    %9 = vector.load %arg4[%c0_5, %c0_6] : memref<128x128xbf16, #tpu.memory_space<vmem>>, vector<128x128xbf16>
    %c0_7 = arith.constant 0 : index
    %c0_8 = arith.constant 0 : index
    %10 = vector.load %arg5[%c0_7, %c0_8] : memref<1x128xf32, #tpu.memory_space<vmem>>, vector<1x128xf32>
    %cst_9 = arith.constant dense<0.000000e+00> : vector<8x128xf32>
    %11 = tpu.matmul %8, %9, %cst_9 {dimension_numbers = #tpu.dot_dimension_numbers<[1], [0], [0], [1], [0, 0, 1, 1], [], []>} : vector<8x128xbf16>, vector<128x128xbf16>, vector<8x128xf32> -> vector<8x128xf32>
    %12 = vector.broadcast %10 : vector<1x128xf32> to vector<8x128xf32>
    %13 = arith.addf %11, %12 : vector<8x128xf32>
    %14 = arith.truncf %13 : vector<8x128xf32> to vector<8x128xbf16>
    %15 = math.tanh %14 : vector<8x128xbf16>
    %c0_10 = arith.constant 0 : index
    %c0_11 = arith.constant 0 : index
    %16 = vector.load %arg6[%c0_10, %c0_11] : memref<1x128xbf16, #tpu.memory_space<vmem>>, vector<1x128xbf16>
    %c0_12 = arith.constant 0 : index
    %c0_13 = arith.constant 0 : index
    %17 = vector.load %arg7[%c0_12, %c0_13] : memref<1x1xf32, #tpu.memory_space<vmem>>, vector<1x1xf32>
    %18 = tpu.transpose %15, [1, 0] : vector<8x128xbf16> -> vector<128x8xbf16>
    %cst_14 = arith.constant dense<0.000000e+00> : vector<1x8xf32>
    %19 = tpu.matmul %16, %18, %cst_14 {dimension_numbers = #tpu.dot_dimension_numbers<[1], [0], [0], [1], [0, 0, 1, 1], [], []>} : vector<1x128xbf16>, vector<128x8xbf16>, vector<1x8xf32> -> vector<1x8xf32>
    %20 = vector.broadcast %17 : vector<1x1xf32> to vector<1x8xf32>
    %21 = arith.addf %19, %20 : vector<1x8xf32>
    %c0_15 = arith.constant 0 : index
    %c0_16 = arith.constant 0 : index
    %22 = vector.load %arg8[%c0_15, %c0_16] : memref<1x8xf32, #tpu.memory_space<vmem>>, vector<1x8xf32>
    tpu.vector_store %arg8[%c0_15, %c0_16], %21 {strides = array<i32>} : memref<1x8xf32, #tpu.memory_space<vmem>>, vector<1x8xf32>,
    return
  }
  func.func @transform_0(%arg0: i32) -> (i32, i32) {
    %c0_i32 = arith.constant 0 : i32
    %c0_i32_0 = arith.constant 0 : i32
    return %arg0, %c0_i32 : i32, i32
  }
  func.func @transform_1(%arg0: i32) -> (i32, i32) {
    %c0_i32 = arith.constant 0 : i32
    %c0_i32_0 = arith.constant 0 : i32
    %c0_i32_1 = arith.constant 0 : i32
    return %c0_i32, %c0_i32_0 : i32, i32
  }
  func.func @transform_2(%arg0: i32) -> (i32, i32) {
    %c0_i32 = arith.constant 0 : i32
    %c0_i32_0 = arith.constant 0 : i32
    %c0_i32_1 = arith.constant 0 : i32
    return %c0_i32, %c0_i32_0 : i32, i32
  }
  func.func @transform_3(%arg0: i32) -> (i32, i32) {
    %c0_i32 = arith.constant 0 : i32
    %c0_i32_0 = arith.constant 0 : i32
    %c0_i32_1 = arith.constant 0 : i32
    return %c0_i32, %c0_i32_0 : i32, i32
  }
  func.func @transform_4(%arg0: i32) -> (i32, i32) {
    %c0_i32 = arith.constant 0 : i32
    %c0_i32_0 = arith.constant 0 : i32
    %c0_i32_1 = arith.constant 0 : i32
    return %c0_i32, %c0_i32_0 : i32, i32
  }
  func.func @transform_5(%arg0: i32) -> (i32, i32) {
    %c0_i32 = arith.constant 0 : i32
    %c0_i32_0 = arith.constant 0 : i32
    %c0_i32_1 = arith.constant 0 : i32
    return %c0_i32, %c0_i32_0 : i32, i32
  }
  func.func @transform_6(%arg0: i32) -> (i32, i32) {
    %c0_i32 = arith.constant 0 : i32
    %c0_i32_0 = arith.constant 0 : i32
    %c0_i32_1 = arith.constant 0 : i32
    return %c0_i32, %c0_i32_0 : i32, i32
  }
  func.func @transform_7(%arg0: i32) -> (i32, i32) {
    %c0_i32 = arith.constant 0 : i32
    %c0_i32_0 = arith.constant 0 : i32
    return %c0_i32, %arg0 : i32, i32
  }
}

</mosaic_0001>

<llo_original>
// kernel: net_uniform_forward.1
$region0: #{net_uniform_forward.1}
  #allocation0 [shape = 'u32[]', space=smem, size = 0x4, offset = 0x4, fixed_abs, tag = 'smem constant byte address 0x4 - core index']
  #allocation1 [shape = 'u32[72,128]{1,0:T(1,128)}', space=vmem, size = 0x9000, scoped, tag = 'internal scratch']
  #allocation2 [shape = 'f32[1,1]{1,0:T(1,128)S(1)}', space=vmem, size = 0x200, scoped, tag = 'scoped memory for net_uniform_forward.1']
  %s0 = inlined_call_operand.vmem [shape: f32[8,4], index: 0, kind: input, shape index: {}]
  %s1 = inlined_call_operand.vmem [shape: bf16[4,128], index: 1, kind: input, shape index: {}]
  %s2 = inlined_call_operand.vmem [shape: f32[1,128], index: 2, kind: input, shape index: {}]
  %s3 = inlined_call_operand.hbm [shape: bf16[128,128], index: 3, kind: input, shape index: {}]
  %s4 = inlined_call_operand.vmem [shape: f32[1,128], index: 4, kind: input, shape index: {}]
  %s5 = inlined_call_operand.vmem [shape: bf16[1,128], index: 5, kind: input, shape index: {}]
  %s6 = inlined_call_operand.<no memory space> [shape: f32[1,1], index: 6, kind: input, shape index: {}]
  %s7 = inlined_call_operand.hbm [shape: f32[1,8], index: 7, kind: output, shape index: {}]
  %s8 = sld [smem:[#allocation0]]
  $region42: #{net_uniform_forward.1} parent=0
    _
  %s10 = ssub.s32 1, %s8
  %s11 = scalar_select 0, %s10, %s8
  %v12 = vstv %s6
  %13 = vst [vmem:[#allocation2] sm:$0x1] %v12
  $region1: #{net_uniform_forward.1} parent=0
    #allocation3 [shape = 'u8[32768]{0}', space=vmem, size = 0x8000, scoped, tag = 'input window, operand 3, single buffered']
    #allocation4 [shape = 's32[1]{0}', space=sflag, size = 0x4, scoped, tag = 'scoped memory for net_uniform_forward.1']
    #allocation5 [shape = 's32[1]{0}', space=sflag, size = 0x4, scoped, tag = 'scoped memory for net_uniform_forward.1']
    #allocation6 [shape = 'u8[512]{0}', space=vmem, size = 0x400, scoped, tag = 'output window, operand 0, single buffered']
    %14 = vsyncpa [#allocation4], 0
    %15 = vsyncpa [#allocation5], 0
    // Predicated region
    $region2: #{net_uniform_forward.1} parent=1 // pred_check
      _
    $region3: #{net_uniform_forward.1} parent=1 // pred_check_branch
      %17 = sbr.rel (0) target = $region5
    $region4: #{net_uniform_forward.1} parent=1 // pred_region
      _
    $region5: #{net_uniform_forward.1} parent=1 // pred_fallthru
      _
    // Predicated region
    $region6: #{net_uniform_forward.1} parent=1 // pred_check
      _
    $region7: #{net_uniform_forward.1} parent=1 // pred_check_branch
      %19 = sbr.rel (0) target = $region9
    $region8: #{net_uniform_forward.1} parent=1 // pred_region
      _
    $region9: #{net_uniform_forward.1} parent=1 // pred_fallthru
      _
    // Predicated region
    $region10: #{net_uniform_forward.1} parent=1 // pred_check
      _
    $region11: #{net_uniform_forward.1} parent=1 // pred_check_branch
      %21 = sbr.rel (0) target = $region13
    $region12: #{net_uniform_forward.1} parent=1 // pred_region
      _
    $region13: #{net_uniform_forward.1} parent=1 // pred_fallthru
      _
    // Predicated region
    $region14: #{net_uniform_forward.1} parent=1 // pred_check
      _
    $region15: #{net_uniform_forward.1} parent=1 // pred_check_branch
      %23 = sbr.rel (0) target = $region17
    $region16: #{net_uniform_forward.1} parent=1 // pred_region
      %25 = vsyncadd [#allocation4], 0
      %s26 = sshll.u32 %s3, 4
      %s27 = int_to_ptr.hbm [resolvable:$true] %s26
      %s28 = sshll.u32 [#allocation3], 4
      %s29 = int_to_ptr.vmem [resolvable:$true] %s28
      %34 = dma.hbm_to_vmem [thread:$0]  %s27, 1024, %s29, [#allocation4], 64, 64, 4
    $region17: #{net_uniform_forward.1} parent=1 // pred_fallthru
      _
    // Predicated region
    $region18: #{net_uniform_forward.1} parent=1 // pred_check
      _
    $region19: #{net_uniform_forward.1} parent=1 // pred_check_branch
      %36 = sbr.rel (0) target = $region21
    $region20: #{net_uniform_forward.1} parent=1 // pred_region
      _
    $region21: #{net_uniform_forward.1} parent=1 // pred_fallthru
      _
    // Predicated region
    $region22: #{net_uniform_forward.1} parent=1 // pred_check
      _
    $region23: #{net_uniform_forward.1} parent=1 // pred_check_branch
      %38 = sbr.rel (0) target = $region25
    $region24: #{net_uniform_forward.1} parent=1 // pred_region
      _
    $region25: #{net_uniform_forward.1} parent=1 // pred_fallthru
      _
    // Predicated region
    $region26: #{net_uniform_forward.1} parent=1 // pred_check
      _
    $region27: #{net_uniform_forward.1} parent=1 // pred_check_branch
      %40 = sbr.rel (0) target = $region29
    $region28: #{net_uniform_forward.1} parent=1 // pred_region
      _
    $region29: #{net_uniform_forward.1} parent=1 // pred_fallthru
      _
    // Predicated region
    $region30: #{net_uniform_forward.1} parent=1 // pred_check
      _
    $region31: #{net_uniform_forward.1} parent=1 // pred_check_branch
      %42 = sbr.rel (0) target = $region33
    $region32: #{net_uniform_forward.1} parent=1 // pred_region
      %44 = dma.done [#allocation4], 1024
    $region33: #{net_uniform_forward.1} parent=1 // pred_fallthru
      _
    %v46 = vld [vmem:[%s0] sm:$0xff]
    %v47 = vld [vmem:[%s1] sm:$0x3]
    %v48 = vld [vmem:[%s2] sm:$0x1]
    %v49 = vpack.c.bf16 %v46, %v46
    %v51 = vperm.slane %v48, 0
    %vm53 = vcmask 31744
    %v55 = vsel %vm53, %v49, 0
    %vm57 = vcmask 1041408
    %v59 = vsel %vm57, %v47, 0
    %61 = vmatpush.bf16.msra.mxu0 0
    %62 = vmatpush.bf16.msra.mxu0 0
    %63 = vmatpush.bf16.msra.mxu0 0
    %64 = vmatpush.bf16.msra.mxu0 0
    %65 = vmatpush.bf16.msra.mxu0 0
    %66 = vmatpush.bf16.msra.mxu0 0
    %67 = vmatpush.bf16.msra.mxu0 0
    %68 = vmatpush.bf16.msra.mxu0 %v59
    %69 = vmatmul.bf16.gmra.mxu0 %v55
    %v70 = vpop.f32.mrf.mxu0
    %v71 = vadd.f32 %v51, %v70
    %v72 = vpop.f32.mrf.mxu0
    %73 = vdwg.mxu0
    %v74 = vpack.c.bf16 %v71, %v71
    %v75 = vunpack.c.l.bf16 %v74
    %v76 = vtanh.pop %v75
    %v77 = vpack.c.bf16 %v76, %v76
    %v78 = vld [vmem:[#allocation3] sm:$0xf]
    %v79 = vld [vmem:[#allocation3 + $0x4] sm:$0xf]
    %v80 = vld [vmem:[#allocation3 + $0x8] sm:$0xf]
    %v81 = vld [vmem:[#allocation3 + $0xc] sm:$0xf]
    %v82 = vld [vmem:[#allocation3 + $0x10] sm:$0xf]
    %v83 = vld [vmem:[#allocation3 + $0x14] sm:$0xf]
    %v84 = vld [vmem:[#allocation3 + $0x18] sm:$0xf]
    %v85 = vld [vmem:[#allocation3 + $0x1c] sm:$0xf]
    %v86 = vld [vmem:[#allocation3 + $0x20] sm:$0xf]
    %v87 = vld [vmem:[#allocation3 + $0x24] sm:$0xf]
    %v88 = vld [vmem:[#allocation3 + $0x28] sm:$0xf]
    %v89 = vld [vmem:[#allocation3 + $0x2c] sm:$0xf]
    %v90 = vld [vmem:[#allocation3 + $0x30] sm:$0xf]
    %v91 = vld [vmem:[#allocation3 + $0x34] sm:$0xf]
    %v92 = vld [vmem:[#allocation3 + $0x38] sm:$0xf]
    %v93 = vld [vmem:[#allocation3 + $0x3c] sm:$0xf]
    %v94 = vld [vmem:[%s4] sm:$0x1]
    %v96 = vperm.slane %v94, 0
    %v114 = vunpack.c.l.b16 %v78
    %v115 = vunpack.c.l.b16 %v79
    %v116 = vunpack.c.l.b16 %v80
    %v117 = vunpack.c.l.b16 %v81
    %v118 = vunpack.c.l.b16 %v82
    %v119 = vunpack.c.l.b16 %v83
    %v120 = vunpack.c.l.b16 %v84
    %v121 = vunpack.c.l.b16 %v85
    %v122 = vunpack.c.l.b16 %v86
    %v123 = vunpack.c.l.b16 %v87
    %v124 = vunpack.c.l.b16 %v88
    %v125 = vunpack.c.l.b16 %v89
    %v126 = vunpack.c.l.b16 %v90
    %v127 = vunpack.c.l.b16 %v91
    %v128 = vunpack.c.l.b16 %v92
    %v129 = vunpack.c.l.b16 %v93
    %v130 = vpack.c.b16 %v115, %v114
    %v131 = vpack.c.b16 %v117, %v116
    %v132 = vpack.c.b16 %v119, %v118
    %v133 = vpack.c.b16 %v121, %v120
    %v134 = vpack.c.b16 %v123, %v122
    %v135 = vpack.c.b16 %v125, %v124
    %v136 = vpack.c.b16 %v127, %v126
    %v137 = vpack.c.b16 %v129, %v128
    %146 = vmatpush.bf16.msra.mxu0 %v137
    %147 = vmatpush.bf16.msra.mxu0 %v136
    %148 = vmatpush.bf16.msra.mxu0 %v135
    %149 = vmatpush.bf16.msra.mxu0 %v134
    %150 = vmatpush.bf16.msra.mxu0 %v133
    %151 = vmatpush.bf16.msra.mxu0 %v132
    %152 = vmatpush.bf16.msra.mxu0 %v131
    %153 = vmatpush.bf16.msra.mxu0 %v130
    %154 = vmatmul.bf16.gmra.mxu0 %v77
    %v155 = vpop.f32.mrf.mxu0
    %v156 = vadd.f32 %v96, %v155
    %v157 = vpop.f32.mrf.mxu0
    %158 = vdwg.mxu0
    %v159 = vpack.c.bf16 %v156, %v156
    %v160 = vunpack.c.l.bf16 %v159
    %v161 = vtanh.pop %v160
    %v162 = vpack.c.bf16 %v161, %v161
    %v163 = vld [vmem:[%s5] sm:$0x1]
    %v164 = vld [vmem:[#allocation2] sm:$0x1]
    %166 = vset.pattern.permute.xlu0 0
    %167 = vperm.xlu0 %166, %v164
    %v168 = vpop.permute.xlu0 %167
    %v170 = vperm.slane %v168, 0
    %171 = vmatpush.bf16.xpose.msra.mxu0 0
    %172 = vmatpush.bf16.xpose.msra.mxu0 0
    %173 = vmatpush.bf16.xpose.msra.mxu0 0
    %174 = vmatpush.bf16.xpose.msra.mxu0 0
    %175 = vmatpush.bf16.xpose.msra.mxu0 0
    %176 = vmatpush.bf16.xpose.msra.mxu0 0
    %177 = vmatpush.bf16.xpose.msra.mxu0 0
    %178 = vmatpush.bf16.xpose.msra.mxu0 %v162
    %179 = vmatmul.bf16.gmra.mxu0 %v163
    %v180 = vpop.f32.mrf.mxu0
    %v181 = vadd.f32 %v170, %v180
    %v182 = vpop.f32.mrf.mxu0
    %183 = vdwg.mxu0
    %vm184 = vcmask 57344
    %185 = vst.msk [vmem:[#allocation6] sm:$0x1] %vm184, %v181
    // Predicated region
    $region34: #{net_uniform_forward.1} parent=1 // pred_check
      _
    $region35: #{net_uniform_forward.1} parent=1 // pred_check_branch
      %187 = sbr.rel (0) target = $region37
    $region36: #{net_uniform_forward.1} parent=1 // pred_region
      %189 = vsyncadd [#allocation5], 0
      %s191 = sshll.u32 [#allocation6], 4
      %s192 = int_to_ptr.vmem [resolvable:$true] %s191
      %s193 = sshll.u32 %s7, 4
      %s194 = int_to_ptr.hbm [resolvable:$true] %s193
      %196 = dma.vmem_to_hbm [thread:$0]  %s192, 16, %s194, [#allocation5]
    $region37: #{net_uniform_forward.1} parent=1 // pred_fallthru
      _
    // Predicated region
    $region38: #{net_uniform_forward.1} parent=1 // pred_check
      _
    $region39: #{net_uniform_forward.1} parent=1 // pred_check_branch
      %198 = sbr.rel (0) target = $region41
    $region40: #{net_uniform_forward.1} parent=1 // pred_region
      %200 = dma.done [#allocation5], 16
    $region41: #{net_uniform_forward.1} parent=1 // pred_fallthru
      _
    %201 = vsyncpa [#allocation4], 1
    %202 = vsyncpa [#allocation5], 1

</llo_original>
